<compile_context>
chip_gen: v7x
topology: tpu7x:2x2x1
jax: 0.10.0
libtpu: 0.0.40
codegen_flags: <defaults>
</compile_context>

<pallas_src>
import functools

import jax
import jax.numpy as jnp
from jax import lax
from jax.experimental import pallas as pl
from jax.experimental.pallas import tpu as pltpu


def _round_up(n, m):
    return ((n + m - 1) // m) * m


def double_critic_kernel(x_ref, w_ref, b_ref, out_ref, *, dp):
    wp = w_ref.shape[-1]                         # fused width (128 for hidden=64)
    x = x_ref[...]                               # (TB, D) f32
    d = x.shape[-1]
    if d < dp:                                   # static: zero-extend K in VMEM
        x = jnp.concatenate(
            [x, jnp.zeros((x.shape[0], dp - d), x.dtype)], axis=1)

    mxu_dtype = w_ref.dtype                      # bf16 (perf) or f32 (exact)

    # Static, aligned row slices of the packed weight slab (views).
    w1 = w_ref[0:dp, :]                          # (Dp, Wp)  [W1_a | W1_b | 0]
    w2 = w_ref[dp:dp + wp, :]                    # (Wp, Wp)  blockdiag(W2_a, W2_b)
    wo = w_ref[dp + wp:dp + wp + 8, :].astype(jnp.float32)  # (8, Wp) rows 2..7 zero

    b1 = b_ref[0:1, :]                           # (1, Wp) f32
    b2 = b_ref[1:2, :]
    bo = b_ref[2:4, 0:1]                         # (2, 1)  [bo_a; bo_b]

    h1 = jnp.tanh(jnp.dot(x.astype(mxu_dtype), w1,
                          preferred_element_type=jnp.float32) + b1)
    h2 = jnp.tanh(jnp.dot(h1.astype(mxu_dtype), w2,
                          preferred_element_type=jnp.float32) + b2)

    # (8, Wp) . (TB, Wp)^T -> (8, TB); only rows 0 (tower A) / 1 (tower B) nonzero.
    out8 = lax.dot_general(wo, h2, (((1,), (1,)), ((), ())),
                           preferred_element_type=jnp.float32)
    out_ref[...] = (out8[0:2, :] + bo).astype(out_ref.dtype)   # lane-dense (2, TB)


def pack_params(p, obs_dim, hidden, weight_dtype=jnp.bfloat16):
    """Pack the 12 per-critic params into one weight slab + one bias slab."""
    H = hidden
    Dp = _round_up(max(obs_dim, 1), 16)                # aligned K for layer 1
    Wp = max(128, _round_up(2 * H, 128))               # 128-lane aligned fused width

    w1 = jnp.zeros((Dp, Wp), jnp.float32)
    w1 = w1.at[:obs_dim, :H].set(p["w1_a"]).at[:obs_dim, H:2 * H].set(p["w1_b"])

    w2 = jnp.zeros((Wp, Wp), jnp.float32)
    w2 = w2.at[:H, :H].set(p["w2_a"]).at[H:2 * H, H:2 * H].set(p["w2_b"])

    # Output weights as two ROWS (transposed output layer) -> (8, Wp), rows 2..7 zero.
    wo = jnp.zeros((8, Wp), jnp.float32)
    wo = wo.at[0, :H].set(p["wo_a"][:, 0]).at[1, H:2 * H].set(p["wo_b"][:, 0])

    w_slab = jnp.concatenate([w1, w2, wo], axis=0).astype(weight_dtype)

    b_slab = jnp.zeros((8, Wp), jnp.float32)
    b_slab = b_slab.at[0, :H].set(p["b1_a"]).at[0, H:2 * H].set(p["b1_b"])
    b_slab = b_slab.at[1, :H].set(p["b2_a"]).at[1, H:2 * H].set(p["b2_b"])
    b_slab = b_slab.at[2, 0].set(p["bo_a"][0]).at[3, 0].set(p["bo_b"][0])
    return w_slab, b_slab, Dp, Wp


def double_critic_forward(x, w_slab, b_slab):
    """x: (B, obs_dim) f32.  Returns (value (B,1), value_ano (B,1))."""
    B, D = x.shape
    Wp = w_slab.shape[1]
    Rw = w_slab.shape[0]
    Dp = Rw - Wp - 8

    # Batch tile: big tiles to amortize per-step overhead; >=2 grid steps once
    # B > 128 so v7x's two TensorCores both get work; multiples of 128 keep the
    # transposed (2, TB) output block lane-aligned.
    if B <= 128:
        TB = B                                   # single full-array block
    else:
        TB = min(1024, _round_up(pl.cdiv(B, 2), 128))
    grid = (pl.cdiv(B, TB),)

    def call(use_buffered):
        def resident(shape):
            if use_buffered:
                return pl.BlockSpec(shape, lambda i: (0, 0),
                                    pipeline_mode=pl.Buffered(1))
            return pl.BlockSpec(shape, lambda i: (0, 0))

        return pl.pallas_call(
            functools.partial(double_critic_kernel, dp=Dp),
            out_shape=jax.ShapeDtypeStruct((2, B), jnp.float32),
            grid=grid,
            in_specs=[
                pl.BlockSpec((TB, D), lambda i: (i, 0)),   # x: tiled on batch, un-padded
                resident((Rw, Wp)),                        # weight slab: VMEM-resident
                resident((8, Wp)),                         # bias slab:   VMEM-resident
            ],
            out_specs=pl.BlockSpec((2, TB), lambda i: (0, i)),  # lane-dense (2, B)
            compiler_params=pltpu.CompilerParams(
                dimension_semantics=("parallel",),         # shard batch across TCs
            ),
        )(x, w_slab, b_slab)

    try:
        out_t = call(use_buffered=True)
    except Exception:
        # pipeline_mode=pl.Buffered(1) not accepted on this jax version/path:
        # fall back to default double-buffering of the (tiny) resident slabs.
        out_t = call(use_buffered=False)

    value = out_t[0, :].reshape(B, 1)        # contiguous row reads, no strided slices
    value_ano = out_t[1, :].reshape(B, 1)
    return value, value_ano


def make_params(key, obs_dim, hidden):
    """Deterministic synthetic parameters in transposed (in, out) form.

    TODO(synk): true nn.init.orthogonal_ initialization not reproduced; scaled normal
    used instead (and non-zero random biases so the bias path is exercised) — the
    forward-pass math is identical for any parameter values.
    """
    ks = jax.random.split(key, 12)

    def w(k, fi, fo):
        return jax.random.normal(k, (fi, fo), jnp.float32) * 0.1

    def b(k, n):
        return jax.random.normal(k, (n,), jnp.float32) * 0.1

    return {
        # critic_base + critic_output
        "w1_a": w(ks[0], obs_dim, hidden), "b1_a": b(ks[1], hidden),
        "w2_a": w(ks[2], hidden, hidden),  "b2_a": b(ks[3], hidden),
        "wo_a": w(ks[4], hidden, 1),       "bo_a": b(ks[5], 1),
        # critic_base_ano + critic_output_ano
        "w1_b": w(ks[6], obs_dim, hidden), "b1_b": b(ks[7], hidden),
        "w2_b": w(ks[8], hidden, hidden),  "b2_b": b(ks[9], hidden),
        "wo_b": w(ks[10], hidden, 1),      "bo_b": b(ks[11], 1),
    }


def reference_forward(x, p):
    """Pure-JAX reference mirroring DoubleCritic.forward (MLP base, Tanh)."""
    def critic(w1, b1, w2, b2, wo, bo):
        h = jnp.tanh(x @ w1 + b1)
        h = jnp.tanh(h @ w2 + b2)
        return h @ wo + bo

    value = critic(p["w1_a"], p["b1_a"], p["w2_a"], p["b2_a"], p["wo_a"], p["bo_a"])
    value_ano = critic(p["w1_b"], p["b1_b"], p["w2_b"], p["b2_b"], p["wo_b"], p["bo_b"])
    return value, value_ano


if __name__ == "__main__":
    OBS_DIM, HIDDEN = 16, 64   # MLPbase default hidden_size=64 -> fused width 2H = 128
    key = jax.random.PRNGKey(0)
    k_x, k_p, k_x2 = jax.random.split(key, 3)

    # --- small demo shape, exact (f32) mode: tight check of the fused math ---
    B = 8
    x = jax.random.normal(k_x, (B, OBS_DIM), jnp.float32)
    params = make_params(k_p, OBS_DIM, HIDDEN)
    ref_v, ref_a = reference_forward(x, params)

    w32, b32, _, _ = pack_params(params, OBS_DIM, HIDDEN, weight_dtype=jnp.float32)
    v, a = double_critic_forward(x, w32, b32)
    jax.block_until_ready((v, a))
    assert v.shape == (B, 1) and a.shape == (B, 1)
    assert jnp.allclose(v, ref_v, atol=1e-5, rtol=1e-5)
    assert jnp.allclose(a, ref_a, atol=1e-5, rtol=1e-5)

    # --- bf16 MXU-operand (perf) mode: looser tolerance (accumulation stays f32) ---
    wbf, bbf, _, _ = pack_params(params, OBS_DIM, HIDDEN, weight_dtype=jnp.bfloat16)
    vb, ab = double_critic_forward(x, wbf, bbf)
    jax.block_until_ready((vb, ab))
    assert jnp.allclose(vb, ref_v, atol=2e-2, rtol=2e-2)
    assert jnp.allclose(ab, ref_a, atol=2e-2, rtol=2e-2)

    # --- multi-step grid, partial last block, non-aligned obs_dim (in-kernel pad) ---
    B2, OBS2 = 300, 17
    params2 = make_params(k_p, OBS2, HIDDEN)
    x2 = jax.random.normal(k_x2, (B2, OBS2), jnp.float32)
    ref_v2, ref_a2 = reference_forward(x2, params2)
    w2s, b2s, _, _ = pack_params(params2, OBS2, HIDDEN, weight_dtype=jnp.float32)
    v2, a2 = double_critic_forward(x2, w2s, b2s)
    jax.block_until_ready((v2, a2))
    assert v2.shape == (B2, 1) and a2.shape == (B2, 1)
    assert jnp.allclose(v2, ref_v2, atol=1e-5, rtol=1e-5)
    assert jnp.allclose(a2, ref_a2, atol=1e-5, rtol=1e-5)

    print("KERNEL_OK")
</pallas_src>

<mosaic_0001>
module attributes {stable_mosaic.version = 11 : i64} {
  func.func @double_critic_kernel(%arg0: i32, %arg1: memref<8x16xf32, #tpu.memory_space<vmem>>, %arg2: memref<152x128xf32, #tpu.memory_space<vmem>>, %arg3: memref<8x128xf32, #tpu.memory_space<vmem>>, %arg4: memref<2x8xf32, #tpu.memory_space<vmem>>) attributes {dimension_semantics = [#tpu.dimension_semantics<parallel>], iteration_bounds = array<i64: 1>, scalar_prefetch = 0 : i64, scratch_operands = 0 : i64, tpu.core_type = #tpu.core_type<tc>, window_params = [{transform_indices = @transform_0, window_bounds = array<i64: 8, 16>}, {pipeline_mode = #tpu.pipeline_mode<synchronous>, transform_indices = @transform_1, window_bounds = array<i64: 152, 128>}, {pipeline_mode = #tpu.pipeline_mode<synchronous>, transform_indices = @transform_2, window_bounds = array<i64: 8, 128>}, {transform_indices = @transform_3, window_bounds = array<i64: 2, 8>}]} {
    %c0 = arith.constant 0 : index
    %c0_0 = arith.constant 0 : index
    %0 = vector.load %arg1[%c0, %c0_0] : memref<8x16xf32, #tpu.memory_space<vmem>>, vector<8x16xf32>
    %c0_1 = arith.constant 0 : index
    %c0_2 = arith.constant 0 : index
    %1 = vector.load %arg2[%c0_1, %c0_2] : memref<152x128xf32, #tpu.memory_space<vmem>>, vector<16x128xf32>
    %c16 = arith.constant 16 : index
    %c0_3 = arith.constant 0 : index
    %2 = vector.load %arg2[%c16, %c0_3] : memref<152x128xf32, #tpu.memory_space<vmem>>, vector<128x128xf32>
    %c144 = arith.constant 144 : index
    %c0_4 = arith.constant 0 : index
    %3 = vector.load %arg2[%c144, %c0_4] : memref<152x128xf32, #tpu.memory_space<vmem>>, vector<8x128xf32>
    %c0_5 = arith.constant 0 : index
    %c0_6 = arith.constant 0 : index
    %4 = vector.load %arg3[%c0_5, %c0_6] : memref<8x128xf32, #tpu.memory_space<vmem>>, vector<1x128xf32>
    %c1 = arith.constant 1 : index
    %c0_7 = arith.constant 0 : index
    %5 = vector.load %arg3[%c1, %c0_7] : memref<8x128xf32, #tpu.memory_space<vmem>>, vector<1x128xf32>
    %c2 = arith.constant 2 : index
    %c0_8 = arith.constant 0 : index
    %6 = vector.load %arg3[%c2, %c0_8] : memref<8x128xf32, #tpu.memory_space<vmem>>, vector<2x1xf32>
    %cst = arith.constant dense<0.000000e+00> : vector<8x128xf32>
    %7 = tpu.matmul %0, %1, %cst {dimension_numbers = #tpu.dot_dimension_numbers<[1], [0], [0], [1], [0, 0, 1, 1], [], []>} : vector<8x16xf32>, vector<16x128xf32>, vector<8x128xf32> -> vector<8x128xf32>
    %8 = vector.broadcast %4 : vector<1x128xf32> to vector<8x128xf32>
    %9 = arith.addf %7, %8 : vector<8x128xf32>
    %10 = math.tanh %9 : vector<8x128xf32>
    %cst_9 = arith.constant dense<0.000000e+00> : vector<8x128xf32>
    %11 = tpu.matmul %10, %2, %cst_9 {dimension_numbers = #tpu.dot_dimension_numbers<[1], [0], [0], [1], [0, 0, 1, 1], [], []>} : vector<8x128xf32>, vector<128x128xf32>, vector<8x128xf32> -> vector<8x128xf32>
    %12 = vector.broadcast %5 : vector<1x128xf32> to vector<8x128xf32>
    %13 = arith.addf %11, %12 : vector<8x128xf32>
    %14 = math.tanh %13 : vector<8x128xf32>
    %cst_10 = arith.constant dense<0.000000e+00> : vector<8x8xf32>
    %15 = tpu.matmul %3, %14, %cst_10 {dimension_numbers = #tpu.dot_dimension_numbers<[1], [1], [0], [0], [0, 0, 1, 0], [], []>} : vector<8x128xf32>, vector<8x128xf32>, vector<8x8xf32> -> vector<8x8xf32>
    %16 = vector.extract_strided_slice %15 {offsets = [0, 0], sizes = [2, 8], strides = [1, 1]} : vector<8x8xf32> to vector<2x8xf32>
    %17 = vector.broadcast %6 : vector<2x1xf32> to vector<2x8xf32>
    %18 = arith.addf %16, %17 : vector<2x8xf32>
    %c0_11 = arith.constant 0 : index
    %c0_12 = arith.constant 0 : index
    %19 = vector.load %arg4[%c0_11, %c0_12] : memref<2x8xf32, #tpu.memory_space<vmem>>, vector<2x8xf32>
    tpu.vector_store %arg4[%c0_11, %c0_12], %18 {strides = array<i32>} : memref<2x8xf32, #tpu.memory_space<vmem>>, vector<2x8xf32>,
    return
  }
  func.func @transform_0(%arg0: i32) -> (i32, i32) {
    %c0_i32 = arith.constant 0 : i32
    %c0_i32_0 = arith.constant 0 : i32
    return %arg0, %c0_i32 : i32, i32
  }
  func.func @transform_1(%arg0: i32) -> (i32, i32) {
    %c0_i32 = arith.constant 0 : i32
    %c0_i32_0 = arith.constant 0 : i32
    %c0_i32_1 = arith.constant 0 : i32
    return %c0_i32, %c0_i32_0 : i32, i32
  }
  func.func @transform_2(%arg0: i32) -> (i32, i32) {
    %c0_i32 = arith.constant 0 : i32
    %c0_i32_0 = arith.constant 0 : i32
    %c0_i32_1 = arith.constant 0 : i32
    return %c0_i32, %c0_i32_0 : i32, i32
  }
  func.func @transform_3(%arg0: i32) -> (i32, i32) {
    %c0_i32 = arith.constant 0 : i32
    %c0_i32_0 = arith.constant 0 : i32
    return %c0_i32, %arg0 : i32, i32
  }
}

module attributes {stable_mosaic.version = 11 : i64} {
  func.func @double_critic_kernel(%arg0: i32, %arg1: memref<8x16xf32, #tpu.memory_space<vmem>>, %arg2: memref<152x128xf32, #tpu.memory_space<vmem>>, %arg3: memref<8x128xf32, #tpu.memory_space<vmem>>, %arg4: memref<2x8xf32, #tpu.memory_space<vmem>>) attributes {dimension_semantics = [#tpu.dimension_semantics<parallel>], iteration_bounds = array<i64: 1>, scalar_prefetch = 0 : i64, scratch_operands = 0 : i64, tpu.core_type = #tpu.core_type<tc>, window_params = [{transform_indices = @transform_0, window_bounds = array<i64: 8, 16>}, {pipeline_mode = #tpu.pipeline_mode<synchronous>, transform_indices = @transform_1, window_bounds = array<i64: 152, 128>}, {pipeline_mode = #tpu.pipeline_mode<synchronous>, transform_indices = @transform_2, window_bounds = array<i64: 8, 128>}, {transform_indices = @transform_3, window_bounds = array<i64: 2, 8>}]} {
    %c0 = arith.constant 0 : index
    %c0_0 = arith.constant 0 : index
    %0 = vector.load %arg1[%c0, %c0_0] : memref<8x16xf32, #tpu.memory_space<vmem>>, vector<8x16xf32>
    %c0_1 = arith.constant 0 : index
    %c0_2 = arith.constant 0 : index
    %1 = vector.load %arg2[%c0_1, %c0_2] : memref<152x128xf32, #tpu.memory_space<vmem>>, vector<16x128xf32>
    %c16 = arith.constant 16 : index
    %c0_3 = arith.constant 0 : index
    %2 = vector.load %arg2[%c16, %c0_3] : memref<152x128xf32, #tpu.memory_space<vmem>>, vector<128x128xf32>
    %c144 = arith.constant 144 : index
    %c0_4 = arith.constant 0 : index
    %3 = vector.load %arg2[%c144, %c0_4] : memref<152x128xf32, #tpu.memory_space<vmem>>, vector<8x128xf32>
    %c0_5 = arith.constant 0 : index
    %c0_6 = arith.constant 0 : index
    %4 = vector.load %arg3[%c0_5, %c0_6] : memref<8x128xf32, #tpu.memory_space<vmem>>, vector<1x128xf32>
    %c1 = arith.constant 1 : index
    %c0_7 = arith.constant 0 : index
    %5 = vector.load %arg3[%c1, %c0_7] : memref<8x128xf32, #tpu.memory_space<vmem>>, vector<1x128xf32>
    %c2 = arith.constant 2 : index
    %c0_8 = arith.constant 0 : index
    %6 = vector.load %arg3[%c2, %c0_8] : memref<8x128xf32, #tpu.memory_space<vmem>>, vector<2x1xf32>
    %cst = arith.constant dense<0.000000e+00> : vector<8x128xf32>
    %7 = tpu.matmul %0, %1, %cst {dimension_numbers = #tpu.dot_dimension_numbers<[1], [0], [0], [1], [0, 0, 1, 1], [], []>} : vector<8x16xf32>, vector<16x128xf32>, vector<8x128xf32> -> vector<8x128xf32>
    %8 = vector.broadcast %4 : vector<1x128xf32> to vector<8x128xf32>
    %9 = arith.addf %7, %8 : vector<8x128xf32>
    %10 = math.tanh %9 : vector<8x128xf32>
    %cst_9 = arith.constant dense<0.000000e+00> : vector<8x128xf32>
    %11 = tpu.matmul %10, %2, %cst_9 {dimension_numbers = #tpu.dot_dimension_numbers<[1], [0], [0], [1], [0, 0, 1, 1], [], []>} : vector<8x128xf32>, vector<128x128xf32>, vector<8x128xf32> -> vector<8x128xf32>
    %12 = vector.broadcast %5 : vector<1x128xf32> to vector<8x128xf32>
    %13 = arith.addf %11, %12 : vector<8x128xf32>
    %14 = math.tanh %13 : vector<8x128xf32>
    %cst_10 = arith.constant dense<0.000000e+00> : vector<8x8xf32>
    %15 = tpu.matmul %3, %14, %cst_10 {dimension_numbers = #tpu.dot_dimension_numbers<[1], [1], [0], [0], [0, 0, 1, 0], [], []>} : vector<8x128xf32>, vector<8x128xf32>, vector<8x8xf32> -> vector<8x8xf32>
    %16 = vector.extract_strided_slice %15 {offsets = [0, 0], sizes = [2, 8], strides = [1, 1]} : vector<8x8xf32> to vector<2x8xf32>
    %17 = vector.broadcast %6 : vector<2x1xf32> to vector<2x8xf32>
    %18 = arith.addf %16, %17 : vector<2x8xf32>
    %c0_11 = arith.constant 0 : index
    %c0_12 = arith.constant 0 : index
    %19 = vector.load %arg4[%c0_11, %c0_12] : memref<2x8xf32, #tpu.memory_space<vmem>>, vector<2x8xf32>
    tpu.vector_store %arg4[%c0_11, %c0_12], %18 {strides = array<i32>} : memref<2x8xf32, #tpu.memory_space<vmem>>, vector<2x8xf32>,
    return
  }
  func.func @transform_0(%arg0: i32) -> (i32, i32) {
    %c0_i32 = arith.constant 0 : i32
    %c0_i32_0 = arith.constant 0 : i32
    return %arg0, %c0_i32 : i32, i32
  }
  func.func @transform_1(%arg0: i32) -> (i32, i32) {
    %c0_i32 = arith.constant 0 : i32
    %c0_i32_0 = arith.constant 0 : i32
    %c0_i32_1 = arith.constant 0 : i32
    return %c0_i32, %c0_i32_0 : i32, i32
  }
  func.func @transform_2(%arg0: i32) -> (i32, i32) {
    %c0_i32 = arith.constant 0 : i32
    %c0_i32_0 = arith.constant 0 : i32
    %c0_i32_1 = arith.constant 0 : i32
    return %c0_i32, %c0_i32_0 : i32, i32
  }
  func.func @transform_3(%arg0: i32) -> (i32, i32) {
    %c0_i32 = arith.constant 0 : i32
    %c0_i32_0 = arith.constant 0 : i32
    return %c0_i32, %arg0 : i32, i32
  }
}

</mosaic_0001>

<llo_original>
// kernel: tpu_custom_call.1
$region0: #{tpu_custom_call.1}
  #allocation0 [shape = 'u32[]', space=smem, size = 0x4, offset = 0x4, fixed_abs, tag = 'smem constant byte address 0x4 - core index']
  #allocation1 [shape = 'u32[144,128]{1,0:T(1,128)}', space=vmem, size = 0x12000, scoped, tag = 'internal scratch']
  %s0 = inlined_call_operand.hbm [shape: f32[8,16], index: 0, kind: input, shape index: {}]
  %s1 = inlined_call_operand.hbm [shape: f32[152,128], index: 1, kind: input, shape index: {}]
  %s2 = inlined_call_operand.hbm [shape: f32[8,128], index: 2, kind: input, shape index: {}]
  %s3 = inlined_call_operand.hbm [shape: f32[2,8], index: 3, kind: output, shape index: {}]
  %s4 = sld [smem:[#allocation0]]
  $region34: #{tpu_custom_call.1} parent=0
    _
  %s6 = ssub.s32 1, %s4
  %s7 = scalar_select 0, %s6, %s4
  $region1: #{tpu_custom_call.1} parent=0
    #allocation2 [shape = 'u8[4096]{0}', space=vmem, size = 0x1000, scoped, tag = 'input window, operand 0, single buffered']
    #allocation3 [shape = 's32[1]{0}', space=sflag, size = 0x4, scoped, tag = 'scoped memory for tpu_custom_call.1']
    #allocation4 [shape = 's32[1]{0}', space=sflag, size = 0x4, scoped, tag = 'scoped memory for tpu_custom_call.1']
    #allocation5 [shape = 'u8[77824]{0}', space=vmem, size = 0x13000, scoped, tag = 'input window, operand 1, single buffered']
    #allocation6 [shape = 's32[1]{0}', space=sflag, size = 0x4, scoped, tag = 'scoped memory for tpu_custom_call.1']
    #allocation7 [shape = 'u8[4096]{0}', space=vmem, size = 0x1000, scoped, tag = 'input window, operand 2, single buffered']
    #allocation8 [shape = 'u8[1024]{0}', space=vmem, size = 0x400, scoped, tag = 'output window, operand 0, single buffered']
    %8 = vsyncpa [#allocation3], 0
    %9 = vsyncpa [#allocation6], 0
    %10 = vsyncpa [#allocation4], 0
    // Predicated region
    $region2: #{tpu_custom_call.1} parent=1 // pred_check
      _
    $region3: #{tpu_custom_call.1} parent=1 // pred_check_branch
      %12 = sbr.rel (0) target = $region5
    $region4: #{tpu_custom_call.1} parent=1 // pred_region
      %s14 = ssub.s32 128, 128
      %15 = vsyncadd [#allocation3], %s14
      %s17 = sshll.u32 [#allocation2], 4
      %s18 = int_to_ptr.vmem [resolvable:$true] %s17
      %20 = dma.hbm_to_vmem [thread:$0]  %s0, 128, %s18, [#allocation3]
    $region5: #{tpu_custom_call.1} parent=1 // pred_fallthru
      _
    // Predicated region
    $region6: #{tpu_custom_call.1} parent=1 // pred_check
      _
    $region7: #{tpu_custom_call.1} parent=1 // pred_check_branch
      %22 = sbr.rel (0) target = $region9
    $region8: #{tpu_custom_call.1} parent=1 // pred_region
      %s24 = ssub.s32 2432, 2432
      %25 = vsyncadd [#allocation6], %s24
      %s26 = sshll.u32 [#allocation5], 4
      %s27 = int_to_ptr.vmem [resolvable:$true] %s26
      %32 = dma.hbm_to_vmem [thread:$0]  %s1, 2432, %s27, [#allocation6], 128, 128, 8
    $region9: #{tpu_custom_call.1} parent=1 // pred_fallthru
      _
    // Predicated region
    $region10: #{tpu_custom_call.1} parent=1 // pred_check
      _
    $region11: #{tpu_custom_call.1} parent=1 // pred_check_branch
      %34 = sbr.rel (0) target = $region13
    $region12: #{tpu_custom_call.1} parent=1 // pred_region
      %s36 = ssub.s32 128, 128
      %37 = vsyncadd [#allocation6], %s36
      %s39 = sshll.u32 [#allocation7], 4
      %s40 = int_to_ptr.vmem [resolvable:$true] %s39
      %42 = dma.hbm_to_vmem [thread:$0]  %s2, 128, %s40, [#allocation6]
    $region13: #{tpu_custom_call.1} parent=1 // pred_fallthru
      _
    // Predicated region
    $region14: #{tpu_custom_call.1} parent=1 // pred_check
      _
    $region15: #{tpu_custom_call.1} parent=1 // pred_check_branch
      %44 = sbr.rel (0) target = $region17
    $region16: #{tpu_custom_call.1} parent=1 // pred_region
      %45 = dma.done [#allocation3], 128
    $region17: #{tpu_custom_call.1} parent=1 // pred_fallthru
      _
    // Predicated region
    $region18: #{tpu_custom_call.1} parent=1 // pred_check
      _
    $region19: #{tpu_custom_call.1} parent=1 // pred_check_branch
      %47 = sbr.rel (0) target = $region21
    $region20: #{tpu_custom_call.1} parent=1 // pred_region
      %48 = dma.done [#allocation6], 2432
    $region21: #{tpu_custom_call.1} parent=1 // pred_fallthru
      _
    // Predicated region
    $region22: #{tpu_custom_call.1} parent=1 // pred_check
      _
    $region23: #{tpu_custom_call.1} parent=1 // pred_check_branch
      %50 = sbr.rel (0) target = $region25
    $region24: #{tpu_custom_call.1} parent=1 // pred_region
      %51 = dma.done [#allocation6], 128
    $region25: #{tpu_custom_call.1} parent=1 // pred_fallthru
      _
    %v52 = vld [vmem:[#allocation2] sm:$0xff]
    %v53 = vld [vmem:[#allocation5] sm:$0xff]
    %v54 = vld [vmem:[#allocation5 + $0x8] sm:$0xff]
    %v55 = vld [vmem:[#allocation5 + $0x10] sm:$0xff]
    %v56 = vld [vmem:[#allocation5 + $0x18] sm:$0xff]
    %v57 = vld [vmem:[#allocation5 + $0x20] sm:$0xff]
    %v58 = vld [vmem:[#allocation5 + $0x28] sm:$0xff]
    %v59 = vld [vmem:[#allocation5 + $0x30] sm:$0xff]
    %v60 = vld [vmem:[#allocation5 + $0x38] sm:$0xff]
    %v61 = vld [vmem:[#allocation5 + $0x40] sm:$0xff]
    %v62 = vld [vmem:[#allocation5 + $0x48] sm:$0xff]
    %v63 = vld [vmem:[#allocation5 + $0x50] sm:$0xff]
    %v64 = vld [vmem:[#allocation5 + $0x58] sm:$0xff]
    %v65 = vld [vmem:[#allocation5 + $0x60] sm:$0xff]
    %v66 = vld [vmem:[#allocation5 + $0x68] sm:$0xff]
    %v67 = vld [vmem:[#allocation5 + $0x70] sm:$0xff]
    %v68 = vld [vmem:[#allocation5 + $0x78] sm:$0xff]
    %v69 = vld [vmem:[#allocation5 + $0x80] sm:$0xff]
    %v70 = vld [vmem:[#allocation5 + $0x88] sm:$0xff]
    %v71 = vld [vmem:[#allocation5 + $0x90] sm:$0xff]
    %v72 = vld [vmem:[#allocation7] sm:$0x1]
    %v73 = vld [vmem:[#allocation7 + $0x1] sm:$0x1]
    %v74 = vld [vmem:[#allocation7 + $0x2] sm:$0x3]
    %v75 = vlaneseq
    %v76 = vshrl.u32 %v75, 7
    %v77 = vsub.s32 0, %v76
    %v78 = vrot.slane %v72, %v77
    %vm79 = vcmask 130048
    %v81 = vsel %vm79, %v52, 0
    %83 = vmatprep.subr.mxu0 0.0
    %84 = vmatpush1.msra.mxu0 %v53
    %85 = vmatprep.subr.mxu0 0.0
    %86 = vmatpush1.msra.mxu0 %v54
    %87 = vmatprep.subr.mxu0 0.0
    %88 = vmatpush1.msra.mxu0 0.0
    %89 = vmatprep.subr.mxu0 0.0
    %90 = vmatpush1.msra.mxu0 0.0
    %91 = vmatprep.subr.mxu0 0.0
    %92 = vmatpush1.msra.mxu0 0.0
    %93 = vmatprep.subr.mxu0 0.0
    %94 = vmatpush1.msra.mxu0 0.0
    %95 = vmatprep.subr.mxu0 0.0
    %96 = vmatpush1.msra.mxu0 0.0
    %97 = vmatprep.subr.mxu0 0.0
    %98 = vmatpush1.msra.mxu0 0.0
    %99 = vmatprep.subr.mxu0 0.0
    %100 = vmatpush1.msra.mxu0 0.0
    %101 = vmatprep.subr.mxu0 0.0
    %102 = vmatpush1.msra.mxu0 0.0
    %103 = vmatprep.subr.mxu0 0.0
    %104 = vmatpush1.msra.mxu0 0.0
    %105 = vmatprep.subr.mxu0 0.0
    %106 = vmatpush1.msra.mxu0 0.0
    %107 = vmatprep.subr.mxu0 0.0
    %108 = vmatpush1.msra.mxu0 0.0
    %109 = vmatprep.subr.mxu0 0.0
    %110 = vmatpush1.msra.mxu0 0.0
    %111 = vmatprep.subr.mxu0 0.0
    %112 = vmatpush1.msra.mxu0 0.0
    %113 = vmatprep.subr.mxu0 0.0
    %114 = vmatpush1.msra.mxu0 0.0
    %115 = vmatprep.subr.mxu0 0.0
    %116 = vmatpush1.msra.mxu0 0.0
    %117 = vmatprep.subr.mxu0 0.0
    %118 = vmatpush1.msra.mxu0 0.0
    %119 = vmatprep.subr.mxu0 0.0
    %120 = vmatpush1.msra.mxu0 0.0
    %121 = vmatprep.subr.mxu0 0.0
    %122 = vmatpush1.msra.mxu0 0.0
    %123 = vmatprep.subr.mxu0 0.0
    %124 = vmatpush1.msra.mxu0 0.0
    %125 = vmatprep.subr.mxu0 0.0
    %126 = vmatpush1.msra.mxu0 0.0
    %127 = vmatprep.subr.mxu0 0.0
    %128 = vmatpush1.msra.mxu0 0.0
    %129 = vmatprep.subr.mxu0 0.0
    %130 = vmatpush1.msra.mxu0 0.0
    %131 = vmatprep.subr.mxu0 0.0
    %132 = vmatpush1.msra.mxu0 0.0
    %133 = vmatprep.subr.mxu0 0.0
    %134 = vmatpush1.msra.mxu0 0.0
    %135 = vmatprep.subr.mxu0 0.0
    %136 = vmatpush1.msra.mxu0 0.0
    %137 = vmatprep.subr.mxu0 0.0
    %138 = vmatpush1.msra.mxu0 0.0
    %139 = vmatprep.subr.mxu0 0.0
    %140 = vmatpush1.msra.mxu0 0.0
    %141 = vmatprep.subr.mxu0 0.0
    %142 = vmatpush1.msra.mxu0 0.0
    %143 = vmatprep.subr.mxu0 0.0
    %144 = vmatpush1.msra.mxu0 0.0
    %145 = vmatprep.subr.mxu0 0.0
    %146 = vmatpush1.msra.mxu0 0.0
    %147 = vmatprep.mubr.f32.mxu0 0.0
    %148 = vmatmul.mubr.f32.gmra.mrb[0].mxu0 %v81
    %v149 = vpop.f32.mrb[0].mxu0
    %v150 = vadd.f32 %v78, %v149
    %v151 = vpop.f32.mrb[0].mxu0
    %152 = vdwg.mxu0
    %v153 = vtanh.pop %v150
    %v154 = vlaneseq
    %v155 = vshrl.u32 %v154, 7
    %v156 = vsub.s32 0, %v155
    %v157 = vrot.slane %v73, %v156
    %158 = vmatprep.subr.mxu0 0.0
    %159 = vmatpush1.msra.mxu0 %v55
    %160 = vmatprep.subr.mxu0 0.0
    %161 = vmatpush1.msra.mxu0 %v56
    %162 = vmatprep.subr.mxu0 0.0
    %163 = vmatpush1.msra.mxu0 %v57
    %164 = vmatprep.subr.mxu0 0.0
    %165 = vmatpush1.msra.mxu0 %v58
    %166 = vmatprep.subr.mxu0 0.0
    %167 = vmatpush1.msra.mxu0 %v59
    %168 = vmatprep.subr.mxu0 0.0
    %169 = vmatpush1.msra.mxu0 %v60
    %170 = vmatprep.subr.mxu0 0.0
    %171 = vmatpush1.msra.mxu0 %v61
    %172 = vmatprep.subr.mxu0 0.0
    %173 = vmatpush1.msra.mxu0 %v62
    %174 = vmatprep.subr.mxu0 0.0
    %175 = vmatpush1.msra.mxu0 %v63
    %176 = vmatprep.subr.mxu0 0.0
    %177 = vmatpush1.msra.mxu0 %v64
    %178 = vmatprep.subr.mxu0 0.0
    %179 = vmatpush1.msra.mxu0 %v65
    %180 = vmatprep.subr.mxu0 0.0
    %181 = vmatpush1.msra.mxu0 %v66
    %182 = vmatprep.subr.mxu0 0.0
    %183 = vmatpush1.msra.mxu0 %v67
    %184 = vmatprep.subr.mxu0 0.0
    %185 = vmatpush1.msra.mxu0 %v68
    %186 = vmatprep.subr.mxu0 0.0
    %187 = vmatpush1.msra.mxu0 %v69
    %188 = vmatprep.subr.mxu0 0.0
    %189 = vmatpush1.msra.mxu0 %v70
    %190 = vmatprep.subr.mxu0 0.0
    %191 = vmatpush1.msra.mxu0 0.0
    %192 = vmatprep.subr.mxu0 0.0
    %193 = vmatpush1.msra.mxu0 0.0
    %194 = vmatprep.subr.mxu0 0.0
    %195 = vmatpush1.msra.mxu0 0.0
    %196 = vmatprep.subr.mxu0 0.0
    %197 = vmatpush1.msra.mxu0 0.0
    %198 = vmatprep.subr.mxu0 0.0
    %199 = vmatpush1.msra.mxu0 0.0
    %200 = vmatprep.subr.mxu0 0.0
    %201 = vmatpush1.msra.mxu0 0.0
    %202 = vmatprep.subr.mxu0 0.0
    %203 = vmatpush1.msra.mxu0 0.0
    %204 = vmatprep.subr.mxu0 0.0
    %205 = vmatpush1.msra.mxu0 0.0
    %206 = vmatprep.subr.mxu0 0.0
    %207 = vmatpush1.msra.mxu0 0.0
    %208 = vmatprep.subr.mxu0 0.0
    %209 = vmatpush1.msra.mxu0 0.0
    %210 = vmatprep.subr.mxu0 0.0
    %211 = vmatpush1.msra.mxu0 0.0
    %212 = vmatprep.subr.mxu0 0.0
    %213 = vmatpush1.msra.mxu0 0.0
    %214 = vmatprep.subr.mxu0 0.0
    %215 = vmatpush1.msra.mxu0 0.0
    %216 = vmatprep.subr.mxu0 0.0
    %217 = vmatpush1.msra.mxu0 0.0
    %218 = vmatprep.subr.mxu0 0.0
    %219 = vmatpush1.msra.mxu0 0.0
    %220 = vmatprep.subr.mxu0 0.0
    %221 = vmatpush1.msra.mxu0 0.0
    %222 = vmatprep.mubr.f32.mxu0 0.0
    %223 = vmatmul.mubr.f32.gmra.mrb[0].mxu0 %v153
    %v224 = vpop.f32.mrb[0].mxu0
    %v225 = vadd.f32 %v157, %v224
    %v226 = vpop.f32.mrb[0].mxu0
    %227 = vdwg.mxu0
    %v228 = vtanh.pop %v225
    %229 = vmatprep.subr.mxu0 0.0
    %230 = vmatpush1.xpose.msra.mxu0 %v228
    %231 = vmatprep.subr.mxu0 0.0
    %232 = vmatpush1.xpose.msra.mxu0 0.0
    %233 = vmatprep.subr.mxu0 0.0
    %234 = vmatpush1.xpose.msra.mxu0 0.0
    %235 = vmatprep.subr.mxu0 0.0
    %236 = vmatpush1.xpose.msra.mxu0 0.0
    %237 = vmatprep.subr.mxu0 0.0
    %238 = vmatpush1.xpose.msra.mxu0 0.0
    %239 = vmatprep.subr.mxu0 0.0
    %240 = vmatpush1.xpose.msra.mxu0 0.0
    %241 = vmatprep.subr.mxu0 0.0
    %242 = vmatpush1.xpose.msra.mxu0 0.0
    %243 = vmatprep.subr.mxu0 0.0
    %244 = vmatpush1.xpose.msra.mxu0 0.0
    %245 = vmatprep.subr.mxu0 0.0
    %246 = vmatpush1.xpose.msra.mxu0 0.0
    %247 = vmatprep.subr.mxu0 0.0
    %248 = vmatpush1.xpose.msra.mxu0 0.0
    %249 = vmatprep.subr.mxu0 0.0
    %250 = vmatpush1.xpose.msra.mxu0 0.0
    %251 = vmatprep.subr.mxu0 0.0
    %252 = vmatpush1.xpose.msra.mxu0 0.0
    %253 = vmatprep.subr.mxu0 0.0
    %254 = vmatpush1.xpose.msra.mxu0 0.0
    %255 = vmatprep.subr.mxu0 0.0
    %256 = vmatpush1.xpose.msra.mxu0 0.0
    %257 = vmatprep.subr.mxu0 0.0
    %258 = vmatpush1.xpose.msra.mxu0 0.0
    %259 = vmatprep.subr.mxu0 0.0
    %260 = vmatpush1.xpose.msra.mxu0 0.0
    %261 = vmatprep.subr.mxu0 0.0
    %262 = vmatpush1.xpose.msra.mxu0 0.0
    %263 = vmatprep.subr.mxu0 0.0
    %264 = vmatpush1.xpose.msra.mxu0 0.0
    %265 = vmatprep.subr.mxu0 0.0
    %266 = vmatpush1.xpose.msra.mxu0 0.0
    %267 = vmatprep.subr.mxu0 0.0
    %268 = vmatpush1.xpose.msra.mxu0 0.0
    %269 = vmatprep.subr.mxu0 0.0
    %270 = vmatpush1.xpose.msra.mxu0 0.0
    %271 = vmatprep.subr.mxu0 0.0
    %272 = vmatpush1.xpose.msra.mxu0 0.0
    %273 = vmatprep.subr.mxu0 0.0
    %274 = vmatpush1.xpose.msra.mxu0 0.0
    %275 = vmatprep.subr.mxu0 0.0
    %276 = vmatpush1.xpose.msra.mxu0 0.0
    %277 = vmatprep.subr.mxu0 0.0
    %278 = vmatpush1.xpose.msra.mxu0 0.0
    %279 = vmatprep.subr.mxu0 0.0
    %280 = vmatpush1.xpose.msra.mxu0 0.0
    %281 = vmatprep.subr.mxu0 0.0
    %282 = vmatpush1.xpose.msra.mxu0 0.0
    %283 = vmatprep.subr.mxu0 0.0
    %284 = vmatpush1.xpose.msra.mxu0 0.0
    %285 = vmatprep.subr.mxu0 0.0
    %286 = vmatpush1.xpose.msra.mxu0 0.0
    %287 = vmatprep.subr.mxu0 0.0
    %288 = vmatpush1.xpose.msra.mxu0 0.0
    %289 = vmatprep.subr.mxu0 0.0
    %290 = vmatpush1.xpose.msra.mxu0 0.0
    %291 = vmatprep.subr.mxu0 0.0
    %292 = vmatpush1.xpose.msra.mxu0 0.0
    %293 = vmatprep.mubr.f32.mxu0 0.0
    %294 = vmatmul.mubr.f32.gmra.mrb[0].mxu0 %v71
    %v295 = vpop.f32.mrb[0].mxu0
    %v296 = vadd.f32 0.0, %v295
    %v297 = vpop.f32.mrb[0].mxu0
    %298 = vdwg.mxu0
    %300 = vset.pattern.permute.xlu0 0
    %301 = vperm.xlu0 %300, %v74
    %v302 = vpop.permute.xlu0 %301
    %v304 = vadd.f32 %v296, %v302
    %vm305 = vcmask 58368
    %306 = vst.msk [vmem:[#allocation8] sm:$0x3] %vm305, %v304
    // Predicated region
    $region26: #{tpu_custom_call.1} parent=1 // pred_check
      _
    $region27: #{tpu_custom_call.1} parent=1 // pred_check_branch
      %308 = sbr.rel (0) target = $region29
    $region28: #{tpu_custom_call.1} parent=1 // pred_region
      %s310 = ssub.s32 32, 32
      %311 = vsyncadd [#allocation4], %s310
      %s313 = sshll.u32 [#allocation8], 4
      %s314 = int_to_ptr.vmem [resolvable:$true] %s313
      %316 = dma.vmem_to_hbm [thread:$0]  %s314, 32, %s3, [#allocation4]
    $region29: #{tpu_custom_call.1} parent=1 // pred_fallthru
      _
    // Predicated region
    $region30: #{tpu_custom_call.1} parent=1 // pred_check
      _
    $region31: #{tpu_custom_call.1} parent=1 // pred_check_branch
      %318 = sbr.rel (0) target = $region33
    $region32: #{tpu_custom_call.1} parent=1 // pred_region
      %319 = dma.done [#allocation4], 32
    $region33: #{tpu_custom_call.1} parent=1 // pred_fallthru
      _
    %320 = vsyncpa [#allocation3], 1
    %321 = vsyncpa [#allocation6], 1
    %322 = vsyncpa [#allocation4], 1

// kernel: tpu_custom_call.1
$region0: #{tpu_custom_call.1}
  #allocation0 [shape = 'u32[]', space=smem, size = 0x4, offset = 0x4, fixed_abs, tag = 'smem constant byte address 0x4 - core index']
  #allocation1 [shape = 'u32[144,128]{1,0:T(1,128)}', space=vmem, size = 0x12000, scoped, tag = 'internal scratch']
  %s0 = inlined_call_operand.hbm [shape: f32[8,16], index: 0, kind: input, shape index: {}]
  %s1 = inlined_call_operand.hbm [shape: f32[152,128], index: 1, kind: input, shape index: {}]
  %s2 = inlined_call_operand.hbm [shape: f32[8,128], index: 2, kind: input, shape index: {}]
  %s3 = inlined_call_operand.hbm [shape: f32[2,8], index: 3, kind: output, shape index: {}]
  %s4 = sld [smem:[#allocation0]]
  $region34: #{tpu_custom_call.1} parent=0
    _
  %s6 = ssub.s32 1, %s4
  %s7 = scalar_select 0, %s6, %s4
  $region1: #{tpu_custom_call.1} parent=0
    #allocation2 [shape = 'u8[4096]{0}', space=vmem, size = 0x1000, scoped, tag = 'input window, operand 0, single buffered']
    #allocation3 [shape = 's32[1]{0}', space=sflag, size = 0x4, scoped, tag = 'scoped memory for tpu_custom_call.1']
    #allocation4 [shape = 's32[1]{0}', space=sflag, size = 0x4, scoped, tag = 'scoped memory for tpu_custom_call.1']
    #allocation5 [shape = 'u8[77824]{0}', space=vmem, size = 0x13000, scoped, tag = 'input window, operand 1, single buffered']
    #allocation6 [shape = 's32[1]{0}', space=sflag, size = 0x4, scoped, tag = 'scoped memory for tpu_custom_call.1']
    #allocation7 [shape = 'u8[4096]{0}', space=vmem, size = 0x1000, scoped, tag = 'input window, operand 2, single buffered']
    #allocation8 [shape = 'u8[1024]{0}', space=vmem, size = 0x400, scoped, tag = 'output window, operand 0, single buffered']
    %8 = vsyncpa [#allocation3], 0
    %9 = vsyncpa [#allocation6], 0
    %10 = vsyncpa [#allocation4], 0
    // Predicated region
    $region2: #{tpu_custom_call.1} parent=1 // pred_check
      _
    $region3: #{tpu_custom_call.1} parent=1 // pred_check_branch
      %12 = sbr.rel (0) target = $region5
    $region4: #{tpu_custom_call.1} parent=1 // pred_region
      %s14 = ssub.s32 128, 128
      %15 = vsyncadd [#allocation3], %s14
      %s17 = sshll.u32 [#allocation2], 4
      %s18 = int_to_ptr.vmem [resolvable:$true] %s17
      %20 = dma.hbm_to_vmem [thread:$0]  %s0, 128, %s18, [#allocation3]
    $region5: #{tpu_custom_call.1} parent=1 // pred_fallthru
      _
    // Predicated region
    $region6: #{tpu_custom_call.1} parent=1 // pred_check
      _
    $region7: #{tpu_custom_call.1} parent=1 // pred_check_branch
      %22 = sbr.rel (0) target = $region9
    $region8: #{tpu_custom_call.1} parent=1 // pred_region
      %s24 = ssub.s32 2432, 2432
      %25 = vsyncadd [#allocation6], %s24
      %s26 = sshll.u32 [#allocation5], 4
      %s27 = int_to_ptr.vmem [resolvable:$true] %s26
      %32 = dma.hbm_to_vmem [thread:$0]  %s1, 2432, %s27, [#allocation6], 128, 128, 8
    $region9: #{tpu_custom_call.1} parent=1 // pred_fallthru
      _
    // Predicated region
    $region10: #{tpu_custom_call.1} parent=1 // pred_check
      _
    $region11: #{tpu_custom_call.1} parent=1 // pred_check_branch
      %34 = sbr.rel (0) target = $region13
    $region12: #{tpu_custom_call.1} parent=1 // pred_region
      %s36 = ssub.s32 128, 128
      %37 = vsyncadd [#allocation6], %s36
      %s39 = sshll.u32 [#allocation7], 4
      %s40 = int_to_ptr.vmem [resolvable:$true] %s39
      %42 = dma.hbm_to_vmem [thread:$0]  %s2, 128, %s40, [#allocation6]
    $region13: #{tpu_custom_call.1} parent=1 // pred_fallthru
      _
    // Predicated region
    $region14: #{tpu_custom_call.1} parent=1 // pred_check
      _
    $region15: #{tpu_custom_call.1} parent=1 // pred_check_branch
      %44 = sbr.rel (0) target = $region17
    $region16: #{tpu_custom_call.1} parent=1 // pred_region
      %45 = dma.done [#allocation3], 128
    $region17: #{tpu_custom_call.1} parent=1 // pred_fallthru
      _
    // Predicated region
    $region18: #{tpu_custom_call.1} parent=1 // pred_check
      _
    $region19: #{tpu_custom_call.1} parent=1 // pred_check_branch
      %47 = sbr.rel (0) target = $region21
    $region20: #{tpu_custom_call.1} parent=1 // pred_region
      %48 = dma.done [#allocation6], 2432
    $region21: #{tpu_custom_call.1} parent=1 // pred_fallthru
      _
    // Predicated region
    $region22: #{tpu_custom_call.1} parent=1 // pred_check
      _
    $region23: #{tpu_custom_call.1} parent=1 // pred_check_branch
      %50 = sbr.rel (0) target = $region25
    $region24: #{tpu_custom_call.1} parent=1 // pred_region
      %51 = dma.done [#allocation6], 128
    $region25: #{tpu_custom_call.1} parent=1 // pred_fallthru
      _
    %v52 = vld [vmem:[#allocation2] sm:$0xff]
    %v53 = vld [vmem:[#allocation5] sm:$0xff]
    %v54 = vld [vmem:[#allocation5 + $0x8] sm:$0xff]
    %v55 = vld [vmem:[#allocation5 + $0x10] sm:$0xff]
    %v56 = vld [vmem:[#allocation5 + $0x18] sm:$0xff]
    %v57 = vld [vmem:[#allocation5 + $0x20] sm:$0xff]
    %v58 = vld [vmem:[#allocation5 + $0x28] sm:$0xff]
    %v59 = vld [vmem:[#allocation5 + $0x30] sm:$0xff]
    %v60 = vld [vmem:[#allocation5 + $0x38] sm:$0xff]
    %v61 = vld [vmem:[#allocation5 + $0x40] sm:$0xff]
    %v62 = vld [vmem:[#allocation5 + $0x48] sm:$0xff]
    %v63 = vld [vmem:[#allocation5 + $0x50] sm:$0xff]
    %v64 = vld [vmem:[#allocation5 + $0x58] sm:$0xff]
    %v65 = vld [vmem:[#allocation5 + $0x60] sm:$0xff]
    %v66 = vld [vmem:[#allocation5 + $0x68] sm:$0xff]
    %v67 = vld [vmem:[#allocation5 + $0x70] sm:$0xff]
    %v68 = vld [vmem:[#allocation5 + $0x78] sm:$0xff]
    %v69 = vld [vmem:[#allocation5 + $0x80] sm:$0xff]
    %v70 = vld [vmem:[#allocation5 + $0x88] sm:$0xff]
    %v71 = vld [vmem:[#allocation5 + $0x90] sm:$0xff]
    %v72 = vld [vmem:[#allocation7] sm:$0x1]
    %v73 = vld [vmem:[#allocation7 + $0x1] sm:$0x1]
    %v74 = vld [vmem:[#allocation7 + $0x2] sm:$0x3]
    %v75 = vlaneseq
    %v76 = vshrl.u32 %v75, 7
    %v77 = vsub.s32 0, %v76
    %v78 = vrot.slane %v72, %v77
    %vm79 = vcmask 130048
    %v81 = vsel %vm79, %v52, 0
    %83 = vmatprep.subr.mxu0 0.0
    %84 = vmatpush1.msra.mxu0 %v53
    %85 = vmatprep.subr.mxu0 0.0
    %86 = vmatpush1.msra.mxu0 %v54
    %87 = vmatprep.subr.mxu0 0.0
    %88 = vmatpush1.msra.mxu0 0.0
    %89 = vmatprep.subr.mxu0 0.0
    %90 = vmatpush1.msra.mxu0 0.0
    %91 = vmatprep.subr.mxu0 0.0
    %92 = vmatpush1.msra.mxu0 0.0
    %93 = vmatprep.subr.mxu0 0.0
    %94 = vmatpush1.msra.mxu0 0.0
    %95 = vmatprep.subr.mxu0 0.0
    %96 = vmatpush1.msra.mxu0 0.0
    %97 = vmatprep.subr.mxu0 0.0
    %98 = vmatpush1.msra.mxu0 0.0
    %99 = vmatprep.subr.mxu0 0.0
    %100 = vmatpush1.msra.mxu0 0.0
    %101 = vmatprep.subr.mxu0 0.0
    %102 = vmatpush1.msra.mxu0 0.0
    %103 = vmatprep.subr.mxu0 0.0
    %104 = vmatpush1.msra.mxu0 0.0
    %105 = vmatprep.subr.mxu0 0.0
    %106 = vmatpush1.msra.mxu0 0.0
    %107 = vmatprep.subr.mxu0 0.0
    %108 = vmatpush1.msra.mxu0 0.0
    %109 = vmatprep.subr.mxu0 0.0
    %110 = vmatpush1.msra.mxu0 0.0
    %111 = vmatprep.subr.mxu0 0.0
    %112 = vmatpush1.msra.mxu0 0.0
    %113 = vmatprep.subr.mxu0 0.0
    %114 = vmatpush1.msra.mxu0 0.0
    %115 = vmatprep.subr.mxu0 0.0
    %116 = vmatpush1.msra.mxu0 0.0
    %117 = vmatprep.subr.mxu0 0.0
    %118 = vmatpush1.msra.mxu0 0.0
    %119 = vmatprep.subr.mxu0 0.0
    %120 = vmatpush1.msra.mxu0 0.0
    %121 = vmatprep.subr.mxu0 0.0
    %122 = vmatpush1.msra.mxu0 0.0
    %123 = vmatprep.subr.mxu0 0.0
    %124 = vmatpush1.msra.mxu0 0.0
    %125 = vmatprep.subr.mxu0 0.0
    %126 = vmatpush1.msra.mxu0 0.0
    %127 = vmatprep.subr.mxu0 0.0
    %128 = vmatpush1.msra.mxu0 0.0
    %129 = vmatprep.subr.mxu0 0.0
    %130 = vmatpush1.msra.mxu0 0.0
    %131 = vmatprep.subr.mxu0 0.0
    %132 = vmatpush1.msra.mxu0 0.0
    %133 = vmatprep.subr.mxu0 0.0
    %134 = vmatpush1.msra.mxu0 0.0
    %135 = vmatprep.subr.mxu0 0.0
    %136 = vmatpush1.msra.mxu0 0.0
    %137 = vmatprep.subr.mxu0 0.0
    %138 = vmatpush1.msra.mxu0 0.0
    %139 = vmatprep.subr.mxu0 0.0
    %140 = vmatpush1.msra.mxu0 0.0
    %141 = vmatprep.subr.mxu0 0.0
    %142 = vmatpush1.msra.mxu0 0.0
    %143 = vmatprep.subr.mxu0 0.0
    %144 = vmatpush1.msra.mxu0 0.0
    %145 = vmatprep.subr.mxu0 0.0
    %146 = vmatpush1.msra.mxu0 0.0
    %147 = vmatprep.mubr.f32.mxu0 0.0
    %148 = vmatmul.mubr.f32.gmra.mrb[0].mxu0 %v81
    %v149 = vpop.f32.mrb[0].mxu0
    %v150 = vadd.f32 %v78, %v149
    %v151 = vpop.f32.mrb[0].mxu0
    %152 = vdwg.mxu0
    %v153 = vtanh.pop %v150
    %v154 = vlaneseq
    %v155 = vshrl.u32 %v154, 7
    %v156 = vsub.s32 0, %v155
    %v157 = vrot.slane %v73, %v156
    %158 = vmatprep.subr.mxu0 0.0
    %159 = vmatpush1.msra.mxu0 %v55
    %160 = vmatprep.subr.mxu0 0.0
    %161 = vmatpush1.msra.mxu0 %v56
    %162 = vmatprep.subr.mxu0 0.0
    %163 = vmatpush1.msra.mxu0 %v57
    %164 = vmatprep.subr.mxu0 0.0
    %165 = vmatpush1.msra.mxu0 %v58
    %166 = vmatprep.subr.mxu0 0.0
    %167 = vmatpush1.msra.mxu0 %v59
    %168 = vmatprep.subr.mxu0 0.0
    %169 = vmatpush1.msra.mxu0 %v60
    %170 = vmatprep.subr.mxu0 0.0
    %171 = vmatpush1.msra.mxu0 %v61
    %172 = vmatprep.subr.mxu0 0.0
    %173 = vmatpush1.msra.mxu0 %v62
    %174 = vmatprep.subr.mxu0 0.0
    %175 = vmatpush1.msra.mxu0 %v63
    %176 = vmatprep.subr.mxu0 0.0
    %177 = vmatpush1.msra.mxu0 %v64
    %178 = vmatprep.subr.mxu0 0.0
    %179 = vmatpush1.msra.mxu0 %v65
    %180 = vmatprep.subr.mxu0 0.0
    %181 = vmatpush1.msra.mxu0 %v66
    %182 = vmatprep.subr.mxu0 0.0
    %183 = vmatpush1.msra.mxu0 %v67
    %184 = vmatprep.subr.mxu0 0.0
    %185 = vmatpush1.msra.mxu0 %v68
    %186 = vmatprep.subr.mxu0 0.0
    %187 = vmatpush1.msra.mxu0 %v69
    %188 = vmatprep.subr.mxu0 0.0
    %189 = vmatpush1.msra.mxu0 %v70
    %190 = vmatprep.subr.mxu0 0.0
    %191 = vmatpush1.msra.mxu0 0.0
    %192 = vmatprep.subr.mxu0 0.0
    %193 = vmatpush1.msra.mxu0 0.0
    %194 = vmatprep.subr.mxu0 0.0
    %195 = vmatpush1.msra.mxu0 0.0
    %196 = vmatprep.subr.mxu0 0.0
    %197 = vmatpush1.msra.mxu0 0.0
    %198 = vmatprep.subr.mxu0 0.0
    %199 = vmatpush1.msra.mxu0 0.0
    %200 = vmatprep.subr.mxu0 0.0
    %201 = vmatpush1.msra.mxu0 0.0
    %202 = vmatprep.subr.mxu0 0.0
    %203 = vmatpush1.msra.mxu0 0.0
    %204 = vmatprep.subr.mxu0 0.0
    %205 = vmatpush1.msra.mxu0 0.0
    %206 = vmatprep.subr.mxu0 0.0
    %207 = vmatpush1.msra.mxu0 0.0
    %208 = vmatprep.subr.mxu0 0.0
    %209 = vmatpush1.msra.mxu0 0.0
    %210 = vmatprep.subr.mxu0 0.0
    %211 = vmatpush1.msra.mxu0 0.0
    %212 = vmatprep.subr.mxu0 0.0
    %213 = vmatpush1.msra.mxu0 0.0
    %214 = vmatprep.subr.mxu0 0.0
    %215 = vmatpush1.msra.mxu0 0.0
    %216 = vmatprep.subr.mxu0 0.0
    %217 = vmatpush1.msra.mxu0 0.0
    %218 = vmatprep.subr.mxu0 0.0
    %219 = vmatpush1.msra.mxu0 0.0
    %220 = vmatprep.subr.mxu0 0.0
    %221 = vmatpush1.msra.mxu0 0.0
    %222 = vmatprep.mubr.f32.mxu0 0.0
    %223 = vmatmul.mubr.f32.gmra.mrb[0].mxu0 %v153
    %v224 = vpop.f32.mrb[0].mxu0
    %v225 = vadd.f32 %v157, %v224
    %v226 = vpop.f32.mrb[0].mxu0
    %227 = vdwg.mxu0
    %v228 = vtanh.pop %v225
    %229 = vmatprep.subr.mxu0 0.0
    %230 = vmatpush1.xpose.msra.mxu0 %v228
    %231 = vmatprep.subr.mxu0 0.0
    %232 = vmatpush1.xpose.msra.mxu0 0.0
    %233 = vmatprep.subr.mxu0 0.0
    %234 = vmatpush1.xpose.msra.mxu0 0.0
    %235 = vmatprep.subr.mxu0 0.0
    %236 = vmatpush1.xpose.msra.mxu0 0.0
    %237 = vmatprep.subr.mxu0 0.0
    %238 = vmatpush1.xpose.msra.mxu0 0.0
    %239 = vmatprep.subr.mxu0 0.0
    %240 = vmatpush1.xpose.msra.mxu0 0.0
    %241 = vmatprep.subr.mxu0 0.0
    %242 = vmatpush1.xpose.msra.mxu0 0.0
    %243 = vmatprep.subr.mxu0 0.0
    %244 = vmatpush1.xpose.msra.mxu0 0.0
    %245 = vmatprep.subr.mxu0 0.0
    %246 = vmatpush1.xpose.msra.mxu0 0.0
    %247 = vmatprep.subr.mxu0 0.0
    %248 = vmatpush1.xpose.msra.mxu0 0.0
    %249 = vmatprep.subr.mxu0 0.0
    %250 = vmatpush1.xpose.msra.mxu0 0.0
    %251 = vmatprep.subr.mxu0 0.0
    %252 = vmatpush1.xpose.msra.mxu0 0.0
    %253 = vmatprep.subr.mxu0 0.0
    %254 = vmatpush1.xpose.msra.mxu0 0.0
    %255 = vmatprep.subr.mxu0 0.0
    %256 = vmatpush1.xpose.msra.mxu0 0.0
    %257 = vmatprep.subr.mxu0 0.0
    %258 = vmatpush1.xpose.msra.mxu0 0.0
    %259 = vmatprep.subr.mxu0 0.0
    %260 = vmatpush1.xpose.msra.mxu0 0.0
    %261 = vmatprep.subr.mxu0 0.0
    %262 = vmatpush1.xpose.msra.mxu0 0.0
    %263 = vmatprep.subr.mxu0 0.0
    %264 = vmatpush1.xpose.msra.mxu0 0.0
    %265 = vmatprep.subr.mxu0 0.0
    %266 = vmatpush1.xpose.msra.mxu0 0.0
    %267 = vmatprep.subr.mxu0 0.0
    %268 = vmatpush1.xpose.msra.mxu0 0.0
    %269 = vmatprep.subr.mxu0 0.0
    %270 = vmatpush1.xpose.msra.mxu0 0.0
    %271 = vmatprep.subr.mxu0 0.0
    %272 = vmatpush1.xpose.msra.mxu0 0.0
    %273 = vmatprep.subr.mxu0 0.0
    %274 = vmatpush1.xpose.msra.mxu0 0.0
    %275 = vmatprep.subr.mxu0 0.0
    %276 = vmatpush1.xpose.msra.mxu0 0.0
    %277 = vmatprep.subr.mxu0 0.0
    %278 = vmatpush1.xpose.msra.mxu0 0.0
    %279 = vmatprep.subr.mxu0 0.0
    %280 = vmatpush1.xpose.msra.mxu0 0.0
    %281 = vmatprep.subr.mxu0 0.0
    %282 = vmatpush1.xpose.msra.mxu0 0.0
    %283 = vmatprep.subr.mxu0 0.0
    %284 = vmatpush1.xpose.msra.mxu0 0.0
    %285 = vmatprep.subr.mxu0 0.0
    %286 = vmatpush1.xpose.msra.mxu0 0.0
    %287 = vmatprep.subr.mxu0 0.0
    %288 = vmatpush1.xpose.msra.mxu0 0.0
    %289 = vmatprep.subr.mxu0 0.0
    %290 = vmatpush1.xpose.msra.mxu0 0.0
    %291 = vmatprep.subr.mxu0 0.0
    %292 = vmatpush1.xpose.msra.mxu0 0.0
    %293 = vmatprep.mubr.f32.mxu0 0.0
    %294 = vmatmul.mubr.f32.gmra.mrb[0].mxu0 %v71
    %v295 = vpop.f32.mrb[0].mxu0
    %v296 = vadd.f32 0.0, %v295
    %v297 = vpop.f32.mrb[0].mxu0
    %298 = vdwg.mxu0
    %300 = vset.pattern.permute.xlu0 0
    %301 = vperm.xlu0 %300, %v74
    %v302 = vpop.permute.xlu0 %301
    %v304 = vadd.f32 %v296, %v302
    %vm305 = vcmask 58368
    %306 = vst.msk [vmem:[#allocation8] sm:$0x3] %vm305, %v304
    // Predicated region
    $region26: #{tpu_custom_call.1} parent=1 // pred_check
      _
    $region27: #{tpu_custom_call.1} parent=1 // pred_check_branch
      %308 = sbr.rel (0) target = $region29
    $region28: #{tpu_custom_call.1} parent=1 // pred_region
      %s310 = ssub.s32 32, 32
      %311 = vsyncadd [#allocation4], %s310
      %s313 = sshll.u32 [#allocation8], 4
      %s314 = int_to_ptr.vmem [resolvable:$true] %s313
      %316 = dma.vmem_to_hbm [thread:$0]  %s314, 32, %s3, [#allocation4]
    $region29: #{tpu_custom_call.1} parent=1 // pred_fallthru
      _
    // Predicated region
    $region30: #{tpu_custom_call.1} parent=1 // pred_check
      _
    $region31: #{tpu_custom_call.1} parent=1 // pred_check_branch
      %318 = sbr.rel (0) target = $region33
    $region32: #{tpu_custom_call.1} parent=1 // pred_region
      %319 = dma.done [#allocation4], 32
    $region33: #{tpu_custom_call.1} parent=1 // pred_fallthru
      _
    %320 = vsyncpa [#allocation3], 1
    %321 = vsyncpa [#allocation6], 1
    %322 = vsyncpa [#allocation4], 1

</llo_original>
